<compile_context>
chip_gen: v7x
topology: tpu7x:2x2x1
jax: 0.10.0
libtpu: 0.0.40
codegen_flags: <defaults>
</compile_context>

<pallas_src>
import math

import jax
import jax.numpy as jnp
from jax.experimental import pallas as pl
from jax.experimental.pallas import tpu as pltpu


def _make_kernel(s_dim, h, a_dim, compute_dtype):
    # Static row offsets of each weight matrix inside the packed weight slab.
    r_w1 = 0
    r_w2 = s_dim
    r_w3 = s_dim + h
    r_wm = s_dim + 3 * h

    def kernel(x_ref, noise_ref, w_ref, vec_ref, action_ref, logp_ref):
        # --- unpack parameters (static slices of the resident VMEM slabs) ---
        w1 = w_ref[r_w1:r_w1 + s_dim, 0:h]
        w2 = w_ref[r_w2:r_w2 + h, 0:2 * h]
        w3 = w_ref[r_w3:r_w3 + 2 * h, 0:h]
        wm = w_ref[r_wm:r_wm + h, 0:a_dim]

        b1 = vec_ref[0:1, 0:h]
        b2 = vec_ref[1:2, 0:2 * h]
        b3 = vec_ref[2:3, 0:h]
        bm = vec_ref[3:4, 0:a_dim]
        std = vec_ref[4:5, 0:a_dim]
        lp_const = vec_ref[5:6, 0:a_dim]     # -log(std) - 0.5*log(2*pi)

        # --- main MLP: 3 MXU matmuls (bf16 in, f32 accumulate) + f32 ReLU ---
        x = x_ref[...].astype(compute_dtype)
        h1 = jnp.dot(x, w1, preferred_element_type=jnp.float32) + b1
        h1 = jnp.maximum(h1, 0.0)
        h2 = jnp.dot(h1.astype(compute_dtype), w2,
                     preferred_element_type=jnp.float32) + b2
        h2 = jnp.maximum(h2, 0.0)
        feat = jnp.dot(h2.astype(compute_dtype), w3,
                       preferred_element_type=jnp.float32) + b3

        # --- DiagGaussian head ---
        mean = jnp.dot(feat.astype(compute_dtype), wm,
                       preferred_element_type=jnp.float32) + bm
        noise = noise_ref[...]               # (TB, a_dim) f32; zeros => mode()
        action = mean + std * noise          # reparameterized dist.sample()

        # FixedNormal.log_probs(action): since action - mean == std * noise,
        # per-element log_prob == -0.5*noise^2 - log(std) - 0.5*log(2*pi).
        log_p = lp_const - 0.5 * (noise * noise)

        action_ref[...] = action
        logp_ref[...] = jnp.sum(log_p, axis=-1, keepdims=True)

    return kernel


def pack_params(params, matmul_dtype=jnp.bfloat16):
    """Pack the 10 parameter arrays into two contiguous slabs."""
    w1, w2, w3, wm = params["w1"], params["w2"], params["w3"], params["wm"]
    s_dim, h = w1.shape
    a_dim = wm.shape[1]
    wcols = max(2 * h, a_dim)

    def pad_cols(a):
        return jnp.pad(a, ((0, 0), (0, wcols - a.shape[1])))

    w_packed = jnp.concatenate(
        [pad_cols(w1), pad_cols(w2), pad_cols(w3), pad_cols(wm)],
        axis=0).astype(matmul_dtype)

    std = params["std"]
    lp_const = -jnp.log(std) - 0.5 * jnp.float32(math.log(2.0 * math.pi))
    vec_packed = jnp.concatenate(
        [pad_cols(v) for v in
         (params["b1"], params["b2"], params["b3"], params["bm"], std, lp_const)],
        axis=0).astype(jnp.float32)

    return {"w": w_packed, "vec": vec_packed,
            "dims": (int(s_dim), int(h), int(a_dim))}


def policy_forward(packed, state, noise, *, batch_tile=512):
    """Runs PolicyNet.forward. Returns (action [B, a_dim], log_probs [B])."""
    s_dim, h, a_dim = packed["dims"]
    B = state.shape[0]
    # TB is either a multiple of 8 (batch_tile default 512) or the full batch,
    # satisfying the (8,128) block constraint in both cases.
    TB = min(batch_tile, B)
    grid = (pl.cdiv(B, TB),)

    w_packed = packed["w"]
    vec_packed = packed["vec"]
    kernel = _make_kernel(s_dim, h, a_dim, w_packed.dtype)

    action, logp = pl.pallas_call(
        kernel,
        grid=grid,
        in_specs=[
            pl.BlockSpec((TB, s_dim), lambda i: (i, 0)),       # state  (streamed)
            pl.BlockSpec((TB, a_dim), lambda i: (i, 0)),       # noise  (streamed)
            pl.BlockSpec(w_packed.shape, lambda i: (0, 0)),    # weights (resident)
            pl.BlockSpec(vec_packed.shape, lambda i: (0, 0)),  # biases/std/const
        ],
        out_specs=[
            pl.BlockSpec((TB, a_dim), lambda i: (i, 0)),
            pl.BlockSpec((TB, 1), lambda i: (i, 0)),
        ],
        out_shape=[jax.ShapeDtypeStruct((B, a_dim), jnp.float32),
                   jax.ShapeDtypeStruct((B, 1), jnp.float32)],
        compiler_params=pltpu.CompilerParams(
            dimension_semantics=("parallel",)),
    )(state, noise, w_packed, vec_packed)

    # PolicyNet.forward returns log_probs shaped [B]: FixedNormal.log_probs
    # does .sum(-1) without keepdim.
    return action, logp[:, 0]


def make_params(key, s_dim, a_dim, n_hidden, std=0.5):
    """Deterministic synthetic parameters (shapes match the PyTorch module)."""
    ks = jax.random.split(key, 8)

    def linear(kw, kb, fan_in, fan_out):
        # mimic nn.Linear default init (uniform +/- 1/sqrt(fan_in))
        bound = 1.0 / math.sqrt(fan_in)
        w = jax.random.uniform(kw, (fan_in, fan_out), jnp.float32, -bound, bound)
        b = jax.random.uniform(kb, (1, fan_out), jnp.float32, -bound, bound)
        return w, b

    w1, b1 = linear(ks[0], ks[1], s_dim, n_hidden)
    w2, b2 = linear(ks[2], ks[3], n_hidden, 2 * n_hidden)
    w3, b3 = linear(ks[4], ks[5], 2 * n_hidden, n_hidden)

    # fc_mean: orthogonal weight, zero bias (as in DiagGaussian's init_)
    a = jax.random.normal(ks[6], (n_hidden, a_dim), jnp.float32)
    q, r = jnp.linalg.qr(a)
    q = q * jnp.sign(jnp.diagonal(r))[None, :]
    wm = q.astype(jnp.float32)
    bm = jnp.zeros((1, a_dim), jnp.float32)

    std_arr = jnp.full((1, a_dim), std, jnp.float32)

    return {"w1": w1, "b1": b1, "w2": w2, "b2": b2, "w3": w3, "b3": b3,
            "wm": wm, "bm": bm, "std": std_arr}


def policy_forward_ref(params, state, noise):
    """Pure-JAX f32 reference matching the PyTorch module semantics."""
    h1 = jnp.maximum(state @ params["w1"] + params["b1"], 0.0)
    h2 = jnp.maximum(h1 @ params["w2"] + params["b2"], 0.0)
    feat = h2 @ params["w3"] + params["b3"]
    mean = feat @ params["wm"] + params["bm"]
    std = params["std"]
    action = mean + std * noise
    log_p = (-((action - mean) ** 2) / (2.0 * std * std)
             - jnp.log(std) - 0.5 * math.log(2.0 * math.pi))
    return action, jnp.sum(log_p, axis=-1)


if __name__ == "__main__":
    key = jax.random.PRNGKey(0)
    B, s_dim, a_dim, n_hidden = 8, 16, 4, 32
    kp, kx, kn = jax.random.split(key, 3)

    params = make_params(kp, s_dim, a_dim, n_hidden, std=0.5)
    packed = pack_params(params, matmul_dtype=jnp.bfloat16)
    state = jax.random.normal(kx, (B, s_dim), jnp.float32)

    deterministic = False
    # TODO(synk): PyTorch dist.sample() uses torch's global RNG; here the
    # standard-normal noise is drawn with JAX and reparameterized (same dist).
    noise = (jnp.zeros((B, a_dim), jnp.float32) if deterministic
             else jax.random.normal(kn, (B, a_dim), jnp.float32))

    action, log_probs = policy_forward(packed, state, noise)
    jax.block_until_ready((action, log_probs))

    assert action.shape == (B, a_dim)
    assert log_probs.shape == (B,)

    # Sanity check vs. pure-JAX f32 reference (loose tol on action due to bf16
    # MXU inputs; log-prob is computed from f32 noise + const so it is tight).
    a_ref, lp_ref = policy_forward_ref(params, state, noise)
    assert float(jnp.max(jnp.abs(action - a_ref))) < 5e-2
    assert float(jnp.max(jnp.abs(log_probs - lp_ref))) < 1e-3

    print("KERNEL_OK")
</pallas_src>

<mosaic_0001>
module attributes {stable_mosaic.version = 11 : i64} {
  func.func @kernel(%arg0: i32, %arg1: memref<8x16xf32, #tpu.memory_space<vmem>>, %arg2: memref<8x4xf32, #tpu.memory_space<vmem>>, %arg3: memref<144x64xbf16, #tpu.memory_space<vmem>>, %arg4: memref<6x64xf32, #tpu.memory_space<vmem>>, %arg5: memref<8x4xf32, #tpu.memory_space<vmem>>, %arg6: memref<8x1xf32, #tpu.memory_space<vmem>>) attributes {dimension_semantics = [#tpu.dimension_semantics<parallel>], iteration_bounds = array<i64: 1>, scalar_prefetch = 0 : i64, scratch_operands = 0 : i64, tpu.core_type = #tpu.core_type<tc>, window_params = [{transform_indices = @transform_0, window_bounds = array<i64: 8, 16>}, {transform_indices = @transform_1, window_bounds = array<i64: 8, 4>}, {pipeline_mode = #tpu.pipeline_mode<synchronous>, transform_indices = @transform_2, window_bounds = array<i64: 144, 64>}, {pipeline_mode = #tpu.pipeline_mode<synchronous>, transform_indices = @transform_3, window_bounds = array<i64: 6, 64>}, {transform_indices = @transform_4, window_bounds = array<i64: 8, 4>}, {transform_indices = @transform_5, window_bounds = array<i64: 8, 1>}]} {
    %c0 = arith.constant 0 : index
    %c0_0 = arith.constant 0 : index
    %0 = vector.load %arg3[%c0, %c0_0] : memref<144x64xbf16, #tpu.memory_space<vmem>>, vector<16x32xbf16>
    %c16 = arith.constant 16 : index
    %c0_1 = arith.constant 0 : index
    %1 = vector.load %arg3[%c16, %c0_1] : memref<144x64xbf16, #tpu.memory_space<vmem>>, vector<32x64xbf16>
    %c48 = arith.constant 48 : index
    %c0_2 = arith.constant 0 : index
    %2 = vector.load %arg3[%c48, %c0_2] : memref<144x64xbf16, #tpu.memory_space<vmem>>, vector<64x32xbf16>
    %c112 = arith.constant 112 : index
    %c0_3 = arith.constant 0 : index
    %3 = vector.load %arg3[%c112, %c0_3] : memref<144x64xbf16, #tpu.memory_space<vmem>>, vector<32x4xbf16>
    %c0_4 = arith.constant 0 : index
    %c0_5 = arith.constant 0 : index
    %4 = vector.load %arg4[%c0_4, %c0_5] : memref<6x64xf32, #tpu.memory_space<vmem>>, vector<1x32xf32>
    %c1 = arith.constant 1 : index
    %c0_6 = arith.constant 0 : index
    %5 = vector.load %arg4[%c1, %c0_6] : memref<6x64xf32, #tpu.memory_space<vmem>>, vector<1x64xf32>
    %c2 = arith.constant 2 : index
    %c0_7 = arith.constant 0 : index
    %6 = vector.load %arg4[%c2, %c0_7] : memref<6x64xf32, #tpu.memory_space<vmem>>, vector<1x32xf32>
    %c3 = arith.constant 3 : index
    %c0_8 = arith.constant 0 : index
    %7 = vector.load %arg4[%c3, %c0_8] : memref<6x64xf32, #tpu.memory_space<vmem>>, vector<1x4xf32>
    %c4 = arith.constant 4 : index
    %c0_9 = arith.constant 0 : index
    %8 = vector.load %arg4[%c4, %c0_9] : memref<6x64xf32, #tpu.memory_space<vmem>>, vector<1x4xf32>
    %c5 = arith.constant 5 : index
    %c0_10 = arith.constant 0 : index
    %9 = vector.load %arg4[%c5, %c0_10] : memref<6x64xf32, #tpu.memory_space<vmem>>, vector<1x4xf32>
    %c0_11 = arith.constant 0 : index
    %c0_12 = arith.constant 0 : index
    %10 = vector.load %arg1[%c0_11, %c0_12] : memref<8x16xf32, #tpu.memory_space<vmem>>, vector<8x16xf32>
    %11 = arith.truncf %10 : vector<8x16xf32> to vector<8x16xbf16>
    %cst = arith.constant dense<0.000000e+00> : vector<8x32xf32>
    %12 = tpu.matmul %11, %0, %cst {dimension_numbers = #tpu.dot_dimension_numbers<[1], [0], [0], [1], [0, 0, 1, 1], [], []>} : vector<8x16xbf16>, vector<16x32xbf16>, vector<8x32xf32> -> vector<8x32xf32>
    %13 = vector.broadcast %4 : vector<1x32xf32> to vector<8x32xf32>
    %14 = arith.addf %12, %13 : vector<8x32xf32>
    %cst_13 = arith.constant 0.000000e+00 : f32
    %15 = vector.broadcast %cst_13 : f32 to vector<8x32xf32>
    %16 = arith.maximumf %14, %15 : vector<8x32xf32>
    %17 = arith.truncf %16 : vector<8x32xf32> to vector<8x32xbf16>
    %cst_14 = arith.constant dense<0.000000e+00> : vector<8x64xf32>
    %18 = tpu.matmul %17, %1, %cst_14 {dimension_numbers = #tpu.dot_dimension_numbers<[1], [0], [0], [1], [0, 0, 1, 1], [], []>} : vector<8x32xbf16>, vector<32x64xbf16>, vector<8x64xf32> -> vector<8x64xf32>
    %19 = vector.broadcast %5 : vector<1x64xf32> to vector<8x64xf32>
    %20 = arith.addf %18, %19 : vector<8x64xf32>
    %cst_15 = arith.constant 0.000000e+00 : f32
    %21 = vector.broadcast %cst_15 : f32 to vector<8x64xf32>
    %22 = arith.maximumf %20, %21 : vector<8x64xf32>
    %23 = arith.truncf %22 : vector<8x64xf32> to vector<8x64xbf16>
    %cst_16 = arith.constant dense<0.000000e+00> : vector<8x32xf32>
    %24 = tpu.matmul %23, %2, %cst_16 {dimension_numbers = #tpu.dot_dimension_numbers<[1], [0], [0], [1], [0, 0, 1, 1], [], []>} : vector<8x64xbf16>, vector<64x32xbf16>, vector<8x32xf32> -> vector<8x32xf32>
    %25 = vector.broadcast %6 : vector<1x32xf32> to vector<8x32xf32>
    %26 = arith.addf %24, %25 : vector<8x32xf32>
    %27 = arith.truncf %26 : vector<8x32xf32> to vector<8x32xbf16>
    %cst_17 = arith.constant dense<0.000000e+00> : vector<8x4xf32>
    %28 = tpu.matmul %27, %3, %cst_17 {dimension_numbers = #tpu.dot_dimension_numbers<[1], [0], [0], [1], [0, 0, 1, 1], [], []>} : vector<8x32xbf16>, vector<32x4xbf16>, vector<8x4xf32> -> vector<8x4xf32>
    %29 = vector.broadcast %7 : vector<1x4xf32> to vector<8x4xf32>
    %30 = arith.addf %28, %29 : vector<8x4xf32>
    %c0_18 = arith.constant 0 : index
    %c0_19 = arith.constant 0 : index
    %31 = vector.load %arg2[%c0_18, %c0_19] : memref<8x4xf32, #tpu.memory_space<vmem>>, vector<8x4xf32>
    %32 = vector.broadcast %8 : vector<1x4xf32> to vector<8x4xf32>
    %33 = arith.mulf %32, %31 : vector<8x4xf32>
    %34 = arith.addf %30, %33 : vector<8x4xf32>
    %35 = arith.mulf %31, %31 : vector<8x4xf32>
    %cst_20 = arith.constant 5.000000e-01 : f32
    %36 = vector.broadcast %cst_20 : f32 to vector<8x4xf32>
    %37 = arith.mulf %36, %35 : vector<8x4xf32>
    %38 = vector.broadcast %9 : vector<1x4xf32> to vector<8x4xf32>
    %39 = arith.subf %38, %37 : vector<8x4xf32>
    %c0_21 = arith.constant 0 : index
    %c0_22 = arith.constant 0 : index
    %40 = vector.load %arg5[%c0_21, %c0_22] : memref<8x4xf32, #tpu.memory_space<vmem>>, vector<8x4xf32>
    tpu.vector_store %arg5[%c0_21, %c0_22], %34 {strides = array<i32>} : memref<8x4xf32, #tpu.memory_space<vmem>>, vector<8x4xf32>,
    %cst_23 = arith.constant dense<0.000000e+00> : vector<8xf32>
    %41 = vector.multi_reduction <add>, %39, %cst_23 [1] : vector<8x4xf32> to vector<8xf32>
    %42 = vector.shape_cast %41 : vector<8xf32> to vector<8x1xf32>
    %c0_24 = arith.constant 0 : index
    %c0_25 = arith.constant 0 : index
    %43 = vector.load %arg6[%c0_24, %c0_25] : memref<8x1xf32, #tpu.memory_space<vmem>>, vector<8x1xf32>
    tpu.vector_store %arg6[%c0_24, %c0_25], %42 {strides = array<i32>} : memref<8x1xf32, #tpu.memory_space<vmem>>, vector<8x1xf32>,
    return
  }
  func.func @transform_0(%arg0: i32) -> (i32, i32) {
    %c0_i32 = arith.constant 0 : i32
    %c0_i32_0 = arith.constant 0 : i32
    return %arg0, %c0_i32 : i32, i32
  }
  func.func @transform_1(%arg0: i32) -> (i32, i32) {
    %c0_i32 = arith.constant 0 : i32
    %c0_i32_0 = arith.constant 0 : i32
    return %arg0, %c0_i32 : i32, i32
  }
  func.func @transform_2(%arg0: i32) -> (i32, i32) {
    %c0_i32 = arith.constant 0 : i32
    %c0_i32_0 = arith.constant 0 : i32
    %c0_i32_1 = arith.constant 0 : i32
    return %c0_i32, %c0_i32_0 : i32, i32
  }
  func.func @transform_3(%arg0: i32) -> (i32, i32) {
    %c0_i32 = arith.constant 0 : i32
    %c0_i32_0 = arith.constant 0 : i32
    %c0_i32_1 = arith.constant 0 : i32
    return %c0_i32, %c0_i32_0 : i32, i32
  }
  func.func @transform_4(%arg0: i32) -> (i32, i32) {
    %c0_i32 = arith.constant 0 : i32
    %c0_i32_0 = arith.constant 0 : i32
    return %arg0, %c0_i32 : i32, i32
  }
  func.func @transform_5(%arg0: i32) -> (i32, i32) {
    %c0_i32 = arith.constant 0 : i32
    %c0_i32_0 = arith.constant 0 : i32
    return %arg0, %c0_i32 : i32, i32
  }
}

</mosaic_0001>

<llo_original>
// kernel: tpu_custom_call.1
$region0: #{tpu_custom_call.1}
  #allocation0 [shape = 'u32[]', space=smem, size = 0x4, offset = 0x4, fixed_abs, tag = 'smem constant byte address 0x4 - core index']
  #allocation1 [shape = 'u32[144,128]{1,0:T(1,128)}', space=vmem, size = 0x12000, scoped, tag = 'internal scratch']
  %s0 = inlined_call_operand.vmem [shape: f32[8,16], index: 0, kind: input, shape index: {}]
  %s1 = inlined_call_operand.vmem [shape: f32[8,4], index: 1, kind: input, shape index: {}]
  %s2 = inlined_call_operand.vmem [shape: bf16[144,64], index: 2, kind: input, shape index: {}]
  %s3 = inlined_call_operand.vmem [shape: f32[6,64], index: 3, kind: input, shape index: {}]
  %s4 = inlined_call_operand.vmem [shape: f32[8,4], index: 4, kind: output, shape index: {0}]
  %s5 = inlined_call_operand.vmem [shape: f32[8,1], index: 5, kind: output, shape index: {1}]
  %6 = xla_tuple %s4, %s5
  %s7 = sld [smem:[#allocation0]]
  $region34: #{tpu_custom_call.1} parent=0
    _
  %s9 = ssub.s32 1, %s7
  %s10 = scalar_select 0, %s9, %s7
  // Predicated region
  $region2: #{tpu_custom_call.1} parent=0 // pred_check
    _
  $region3: #{tpu_custom_call.1} parent=0 // pred_check_branch
    %12 = sbr.rel (0) target = $region5
  $region4: #{tpu_custom_call.1} parent=0 // pred_region
    _
  $region5: #{tpu_custom_call.1} parent=0 // pred_fallthru
    _
  // Predicated region
  $region6: #{tpu_custom_call.1} parent=0 // pred_check
    _
  $region7: #{tpu_custom_call.1} parent=0 // pred_check_branch
    %14 = sbr.rel (0) target = $region9
  $region8: #{tpu_custom_call.1} parent=0 // pred_region
    _
  $region9: #{tpu_custom_call.1} parent=0 // pred_fallthru
    _
  // Predicated region
  $region10: #{tpu_custom_call.1} parent=0 // pred_check
    _
  $region11: #{tpu_custom_call.1} parent=0 // pred_check_branch
    %16 = sbr.rel (0) target = $region13
  $region12: #{tpu_custom_call.1} parent=0 // pred_region
    _
  $region13: #{tpu_custom_call.1} parent=0 // pred_fallthru
    _
  // Predicated region
  $region14: #{tpu_custom_call.1} parent=0 // pred_check
    _
  $region15: #{tpu_custom_call.1} parent=0 // pred_check_branch
    %18 = sbr.rel (0) target = $region17
  $region16: #{tpu_custom_call.1} parent=0 // pred_region
    _
  $region17: #{tpu_custom_call.1} parent=0 // pred_fallthru
    _
  %v20 = vld [vmem:[%s2] sm:$0xf]
  %v21 = vld [vmem:[%s2 + $0x4] sm:$0xf]
  %v22 = vld [vmem:[%s2 + $0x8] sm:$0xf]
  %v23 = vld [vmem:[%s2 + $0xc] sm:$0xf]
  %v24 = vld [vmem:[%s2 + $0x10] sm:$0xf]
  %v25 = vld [vmem:[%s2 + $0x14] sm:$0xf]
  %v26 = vld [vmem:[%s2 + $0x18] sm:$0xf]
  %v27 = vld [vmem:[%s2 + $0x1c] sm:$0xf]
  %v28 = vld [vmem:[%s2 + $0x20] sm:$0xf]
  %v29 = vld [vmem:[%s2 + $0x24] sm:$0xf]
  %v30 = vld [vmem:[%s2 + $0x28] sm:$0xf]
  %v31 = vld [vmem:[%s2 + $0x2c] sm:$0xf]
  %v32 = vld [vmem:[%s2 + $0x30] sm:$0xf]
  %v33 = vld [vmem:[%s2 + $0x34] sm:$0xf]
  %v34 = vld [vmem:[%s2 + $0x38] sm:$0xf]
  %v35 = vld [vmem:[%s2 + $0x3c] sm:$0xf]
  %v36 = vld [vmem:[%s2 + $0x40] sm:$0xf]
  %v37 = vld [vmem:[%s2 + $0x44] sm:$0xf]
  %v38 = vld [vmem:[%s3] sm:$0x1]
  %v39 = vld [vmem:[%s3 + $0x1] sm:$0x1]
  %v40 = vld [vmem:[%s3 + $0x2] sm:$0x1]
  %v41 = vld [vmem:[%s3 + $0x3] sm:$0x1]
  %v42 = vld [vmem:[%s3 + $0x4] sm:$0x1]
  %v43 = vld [vmem:[%s3 + $0x5] sm:$0x1]
  %v44 = vld [vmem:[%s0] sm:$0xff]
  %v45 = vpack.c.bf16 %v44, %v44
  %v46 = vlaneseq
  %v47 = vshrl.u32 %v46, 7
  %v48 = vsub.s32 0, %v47
  %v49 = vrot.slane %v38, %v48
  %v52 = vunpack.c.l.b16 %v20
  %v53 = vunpack.c.l.b16 %v21
  %v54 = vpack.c.b16 %v53, %v52
  %vm56 = vcmask 130048
  %v58 = vsel %vm56, %v45, 0
  %60 = vmatprep.subr.bf16.mxu0 0
  %61 = vmatpush1.bf16.msra.mxu0 %v54
  %62 = vmatprep.subr.bf16.mxu0 0
  %63 = vmatpush1.bf16.msra.mxu0 0
  %64 = vmatprep.subr.bf16.mxu0 0
  %65 = vmatpush1.bf16.msra.mxu0 0
  %66 = vmatprep.subr.bf16.mxu0 0
  %67 = vmatpush1.bf16.msra.mxu0 0
  %68 = vmatprep.subr.bf16.mxu0 0
  %69 = vmatpush1.bf16.msra.mxu0 0
  %70 = vmatprep.subr.bf16.mxu0 0
  %71 = vmatpush1.bf16.msra.mxu0 0
  %72 = vmatprep.subr.bf16.mxu0 0
  %73 = vmatpush1.bf16.msra.mxu0 0
  %74 = vmatprep.subr.bf16.mxu0 0
  %75 = vmatpush1.bf16.msra.mxu0 0
  %76 = vmatprep.subr.bf16.mxu0 0
  %77 = vmatpush1.bf16.msra.mxu0 0
  %78 = vmatprep.subr.bf16.mxu0 0
  %79 = vmatpush1.bf16.msra.mxu0 0
  %80 = vmatprep.subr.bf16.mxu0 0
  %81 = vmatpush1.bf16.msra.mxu0 0
  %82 = vmatprep.subr.bf16.mxu0 0
  %83 = vmatpush1.bf16.msra.mxu0 0
  %84 = vmatprep.subr.bf16.mxu0 0
  %85 = vmatpush1.bf16.msra.mxu0 0
  %86 = vmatprep.subr.bf16.mxu0 0
  %87 = vmatpush1.bf16.msra.mxu0 0
  %88 = vmatprep.subr.bf16.mxu0 0
  %89 = vmatpush1.bf16.msra.mxu0 0
  %90 = vmatprep.subr.bf16.mxu0 0
  %91 = vmatpush1.bf16.msra.mxu0 0
  %92 = vmatprep.mubr.bf16.mxu0 0
  %93 = vmatmul.mubr.bf16.gmra.mrb[0].mxu0 %v58
  %v94 = vpop.f32.mrb[0].mxu0
  %v95 = vadd.f32 %v49, %v94
  %v96 = vpop.f32.mrb[0].mxu0
  %v97 = vpop.f32.mrb[0].mxu0
  %v98 = vpop.f32.mrb[0].mxu0
  %99 = vdwg.mxu0
  %v100 = vmax.f32 %v95, 0.0
  %v101 = vpack.c.bf16 %v100, %v100
  %v102 = vlaneseq
  %v103 = vshrl.u32 %v102, 7
  %v104 = vsub.s32 0, %v103
  %v105 = vrot.slane %v39, %v104
  %v110 = vunpack.c.l.b16 %v22
  %v111 = vunpack.c.l.b16 %v23
  %v112 = vunpack.c.l.b16 %v24
  %v113 = vunpack.c.l.b16 %v25
  %v114 = vpack.c.b16 %v111, %v110
  %v115 = vpack.c.b16 %v113, %v112
  %vm118 = vcmask 261120
  %v120 = vsel %vm118, %v101, 0
  %122 = vmatprep.subr.bf16.mxu0 0
  %123 = vmatpush1.bf16.msra.mxu0 %v114
  %124 = vmatprep.subr.bf16.mxu0 0
  %125 = vmatpush1.bf16.msra.mxu0 %v115
  %126 = vmatprep.subr.bf16.mxu0 0
  %127 = vmatpush1.bf16.msra.mxu0 0
  %128 = vmatprep.subr.bf16.mxu0 0
  %129 = vmatpush1.bf16.msra.mxu0 0
  %130 = vmatprep.subr.bf16.mxu0 0
  %131 = vmatpush1.bf16.msra.mxu0 0
  %132 = vmatprep.subr.bf16.mxu0 0
  %133 = vmatpush1.bf16.msra.mxu0 0
  %134 = vmatprep.subr.bf16.mxu0 0
  %135 = vmatpush1.bf16.msra.mxu0 0
  %136 = vmatprep.subr.bf16.mxu0 0
  %137 = vmatpush1.bf16.msra.mxu0 0
  %138 = vmatprep.subr.bf16.mxu0 0
  %139 = vmatpush1.bf16.msra.mxu0 0
  %140 = vmatprep.subr.bf16.mxu0 0
  %141 = vmatpush1.bf16.msra.mxu0 0
  %142 = vmatprep.subr.bf16.mxu0 0
  %143 = vmatpush1.bf16.msra.mxu0 0
  %144 = vmatprep.subr.bf16.mxu0 0
  %145 = vmatpush1.bf16.msra.mxu0 0
  %146 = vmatprep.subr.bf16.mxu0 0
  %147 = vmatpush1.bf16.msra.mxu0 0
  %148 = vmatprep.subr.bf16.mxu0 0
  %149 = vmatpush1.bf16.msra.mxu0 0
  %150 = vmatprep.subr.bf16.mxu0 0
  %151 = vmatpush1.bf16.msra.mxu0 0
  %152 = vmatprep.subr.bf16.mxu0 0
  %153 = vmatpush1.bf16.msra.mxu0 0
  %154 = vmatprep.mubr.bf16.mxu0 0
  %155 = vmatmul.mubr.bf16.gmra.mrb[0].mxu0 %v120
  %v156 = vpop.f32.mrb[0].mxu0
  %v157 = vadd.f32 %v105, %v156
  %v158 = vpop.f32.mrb[0].mxu0
  %v159 = vpop.f32.mrb[0].mxu0
  %v160 = vpop.f32.mrb[0].mxu0
  %161 = vdwg.mxu0
  %v162 = vmax.f32 %v157, 0.0
  %v163 = vpack.c.bf16 %v162, %v162
  %v164 = vlaneseq
  %v165 = vshrl.u32 %v164, 7
  %v166 = vsub.s32 0, %v165
  %v167 = vrot.slane %v40, %v166
  %v176 = vunpack.c.l.b16 %v26
  %v177 = vunpack.c.l.b16 %v27
  %v178 = vunpack.c.l.b16 %v28
  %v179 = vunpack.c.l.b16 %v29
  %v180 = vunpack.c.l.b16 %v30
  %v181 = vunpack.c.l.b16 %v31
  %v182 = vunpack.c.l.b16 %v32
  %v183 = vunpack.c.l.b16 %v33
  %v184 = vpack.c.b16 %v177, %v176
  %v185 = vpack.c.b16 %v179, %v178
  %v186 = vpack.c.b16 %v181, %v180
  %v187 = vpack.c.b16 %v183, %v182
  %vm192 = vcmask 523264
  %v194 = vsel %vm192, %v163, 0
  %196 = vmatprep.subr.bf16.mxu0 0
  %197 = vmatpush1.bf16.msra.mxu0 %v184
  %198 = vmatprep.subr.bf16.mxu0 0
  %199 = vmatpush1.bf16.msra.mxu0 %v185
  %200 = vmatprep.subr.bf16.mxu0 0
  %201 = vmatpush1.bf16.msra.mxu0 %v186
  %202 = vmatprep.subr.bf16.mxu0 0
  %203 = vmatpush1.bf16.msra.mxu0 %v187
  %204 = vmatprep.subr.bf16.mxu0 0
  %205 = vmatpush1.bf16.msra.mxu0 0
  %206 = vmatprep.subr.bf16.mxu0 0
  %207 = vmatpush1.bf16.msra.mxu0 0
  %208 = vmatprep.subr.bf16.mxu0 0
  %209 = vmatpush1.bf16.msra.mxu0 0
  %210 = vmatprep.subr.bf16.mxu0 0
  %211 = vmatpush1.bf16.msra.mxu0 0
  %212 = vmatprep.subr.bf16.mxu0 0
  %213 = vmatpush1.bf16.msra.mxu0 0
  %214 = vmatprep.subr.bf16.mxu0 0
  %215 = vmatpush1.bf16.msra.mxu0 0
  %216 = vmatprep.subr.bf16.mxu0 0
  %217 = vmatpush1.bf16.msra.mxu0 0
  %218 = vmatprep.subr.bf16.mxu0 0
  %219 = vmatpush1.bf16.msra.mxu0 0
  %220 = vmatprep.subr.bf16.mxu0 0
  %221 = vmatpush1.bf16.msra.mxu0 0
  %222 = vmatprep.subr.bf16.mxu0 0
  %223 = vmatpush1.bf16.msra.mxu0 0
  %224 = vmatprep.subr.bf16.mxu0 0
  %225 = vmatpush1.bf16.msra.mxu0 0
  %226 = vmatprep.subr.bf16.mxu0 0
  %227 = vmatpush1.bf16.msra.mxu0 0
  %228 = vmatprep.mubr.bf16.mxu0 0
  %229 = vmatmul.mubr.bf16.gmra.mrb[0].mxu0 %v194
  %v230 = vpop.f32.mrb[0].mxu0
  %v231 = vadd.f32 %v167, %v230
  %v232 = vpop.f32.mrb[0].mxu0
  %v233 = vpop.f32.mrb[0].mxu0
  %v234 = vpop.f32.mrb[0].mxu0
  %235 = vdwg.mxu0
  %v236 = vpack.c.bf16 %v231, %v231
  %v237 = vlaneseq
  %v238 = vshrl.u32 %v237, 7
  %v239 = vsub.s32 0, %v238
  %v240 = vrot.slane %v41, %v239
  %v245 = vunpack.c.l.b16 %v34
  %v246 = vunpack.c.l.b16 %v35
  %v247 = vunpack.c.l.b16 %v36
  %v248 = vunpack.c.l.b16 %v37
  %v249 = vpack.c.b16 %v246, %v245
  %v250 = vpack.c.b16 %v248, %v247
  %v254 = vsel %vm118, %v236, 0
  %256 = vmatprep.subr.bf16.mxu0 0
  %257 = vmatpush1.bf16.msra.mxu0 %v249
  %258 = vmatprep.subr.bf16.mxu0 0
  %259 = vmatpush1.bf16.msra.mxu0 %v250
  %260 = vmatprep.subr.bf16.mxu0 0
  %261 = vmatpush1.bf16.msra.mxu0 0
  %262 = vmatprep.subr.bf16.mxu0 0
  %263 = vmatpush1.bf16.msra.mxu0 0
  %264 = vmatprep.subr.bf16.mxu0 0
  %265 = vmatpush1.bf16.msra.mxu0 0
  %266 = vmatprep.subr.bf16.mxu0 0
  %267 = vmatpush1.bf16.msra.mxu0 0
  %268 = vmatprep.subr.bf16.mxu0 0
  %269 = vmatpush1.bf16.msra.mxu0 0
  %270 = vmatprep.subr.bf16.mxu0 0
  %271 = vmatpush1.bf16.msra.mxu0 0
  %272 = vmatprep.subr.bf16.mxu0 0
  %273 = vmatpush1.bf16.msra.mxu0 0
  %274 = vmatprep.subr.bf16.mxu0 0
  %275 = vmatpush1.bf16.msra.mxu0 0
  %276 = vmatprep.subr.bf16.mxu0 0
  %277 = vmatpush1.bf16.msra.mxu0 0
  %278 = vmatprep.subr.bf16.mxu0 0
  %279 = vmatpush1.bf16.msra.mxu0 0
  %280 = vmatprep.subr.bf16.mxu0 0
  %281 = vmatpush1.bf16.msra.mxu0 0
  %282 = vmatprep.subr.bf16.mxu0 0
  %283 = vmatpush1.bf16.msra.mxu0 0
  %284 = vmatprep.subr.bf16.mxu0 0
  %285 = vmatpush1.bf16.msra.mxu0 0
  %286 = vmatprep.subr.bf16.mxu0 0
  %287 = vmatpush1.bf16.msra.mxu0 0
  %288 = vmatprep.mubr.bf16.mxu0 0
  %289 = vmatmul.mubr.bf16.gmra.mrb[0].mxu0 %v254
  %v290 = vpop.f32.mrb[0].mxu0
  %v291 = vadd.f32 %v240, %v290
  %v292 = vpop.f32.mrb[0].mxu0
  %v293 = vpop.f32.mrb[0].mxu0
  %v294 = vpop.f32.mrb[0].mxu0
  %295 = vdwg.mxu0
  %v296 = vld [vmem:[%s1] sm:$0xff]
  %v297 = vlaneseq
  %v298 = vshrl.u32 %v297, 7
  %v299 = vsub.s32 0, %v298
  %v300 = vrot.slane %v42, %v299
  %v301 = vmul.f32 %v300, %v296
  %v302 = vadd.f32 %v291, %v301
  %v303 = vmul.f32 %v296, %v296
  %v304 = vmul.f32 %v303, 0.5
  %v305 = vlaneseq
  %v306 = vshrl.u32 %v305, 7
  %v307 = vsub.s32 0, %v306
  %v308 = vrot.slane %v43, %v307
  %v309 = vsub.f32 %v308, %v304
  %vm310 = vcmask 31744
  %311 = vst.msk [vmem:[%s4] sm:$0xff] %vm310, %v302
  %v312 = vsel %vm310, %v309, 0.0
  %313 = vadd.xlane.f32.xlu0 %v312
  %v314 = vpop.xlane.xlu0 %313
  %vm315 = vcmask 7168
  %316 = vst.msk [vmem:[%s5] sm:$0xff] %vm315, %v314
  // Predicated region
  $region18: #{tpu_custom_call.1} parent=0 // pred_check
    _
  $region19: #{tpu_custom_call.1} parent=0 // pred_check_branch
    %318 = sbr.rel (0) target = $region21
  $region20: #{tpu_custom_call.1} parent=0 // pred_region
    _
  $region21: #{tpu_custom_call.1} parent=0 // pred_fallthru
    _
  // Predicated region
  $region22: #{tpu_custom_call.1} parent=0 // pred_check
    _
  $region23: #{tpu_custom_call.1} parent=0 // pred_check_branch
    %320 = sbr.rel (0) target = $region25
  $region24: #{tpu_custom_call.1} parent=0 // pred_region
    _
  $region25: #{tpu_custom_call.1} parent=0 // pred_fallthru
    _
  // Predicated region
  $region26: #{tpu_custom_call.1} parent=0 // pred_check
    _
  $region27: #{tpu_custom_call.1} parent=0 // pred_check_branch
    %322 = sbr.rel (0) target = $region29
  $region28: #{tpu_custom_call.1} parent=0 // pred_region
    _
  $region29: #{tpu_custom_call.1} parent=0 // pred_fallthru
    _
  // Predicated region
  $region30: #{tpu_custom_call.1} parent=0 // pred_check
    _
  $region31: #{tpu_custom_call.1} parent=0 // pred_check_branch
    %324 = sbr.rel (0) target = $region33
  $region32: #{tpu_custom_call.1} parent=0 // pred_region
    _
  $region33: #{tpu_custom_call.1} parent=0 // pred_fallthru
    _

</llo_original>
